<compile_context>
chip_gen: v5e
topology: v5e:2x2
jax: 0.10.0
libtpu: 0.0.40
codegen_flags: <defaults>
</compile_context>

<pallas_src>
import jax
import jax.numpy as jnp
from jax.experimental import pallas as pl
from jax.experimental.pallas import tpu as pltpu

NEG_SLOPE = 0.01   # nn.LeakyReLU() default negative_slope
_LANE = 128


def _leaky_relu(x):
    # 2 VALU ops (mul + max); bit-identical to where(x>0, x, s*x) for 0 < s < 1.
    return jnp.maximum(x, NEG_SLOPE * x)


def _round_up(n, m):
    return ((n + m - 1) // m) * m


def history_mlp_kernel(x_ref, t_ref, f0_ref, left_ref, invdx_ref, dh_ref,
                       w1x_ref, w1h_ref, w1t_ref, wmid_ref, wout_r_ref, o_ref):
    """One batch tile: in-kernel linear interp + fc1 + mid layers + out (all VMEM-resident)."""
    od = wmid_ref.dtype                  # MXU operand dtype (bf16 default); accum stays f32
    tt = t_ref[...].astype(jnp.float32)  # (TN, 1)

    # hist = jnp.interp(t, t_history, history), rewritten (increasing t_history) as
    #   fp[0] + sum_j (fp[j+1]-fp[j]) * clip((t - xp[j]) * inv_dx_j, 0, 1)
    # Padded lanes carry dh == 0 so they contribute nothing.  Pure VPU + one lane reduce.
    # TODO(synk): for histories with thousands of breakpoints switch to a bucketed /
    # scalar-prefetched segment scheme before this VPU term overtakes the matmuls.
    frac = jnp.clip((tt - left_ref[...]) * invdx_ref[...], 0.0, 1.0)              # (TN, GP)
    hist = f0_ref[...] + jnp.sum(frac * dh_ref[...], axis=-1, keepdims=True)      # (TN, 1)

    # fc1 (bias=False) on x_in = cat([x, hist, t], -1) without materializing the concat:
    #   x_in @ W1 == sum_j x[:,j] * W1[j] + hist * W1[Dx] + t * W1[Dx+1]
    # With K <= 8 a matmul wastes a full layer's worth of MXU pushes, so the whole fc1
    # stays on the (idle) VPU as rank-1 broadcast-FMA updates.
    h = hist * w1h_ref[...].astype(jnp.float32) + tt * w1t_ref[...].astype(jnp.float32)
    dx = x_ref.shape[1]
    if dx <= 8:
        xx = x_ref[...].astype(jnp.float32)                      # (TN, Dx)
        w1x = w1x_ref[...].astype(jnp.float32)                   # (Dx, HP)
        for j in range(dx):                                      # static unroll
            h = h + xx[:, j:j + 1] * w1x[j:j + 1, :]
    else:
        h = h + jnp.dot(x_ref[...].astype(od), w1x_ref[...],
                        preferred_element_type=jnp.float32)
    h = _leaky_relu(h)                   # bn=False -> act right after fc1

    for i in range(wmid_ref.shape[0]):   # static unroll over `layers` mid blocks (MXU)
        h = jnp.dot(h.astype(od), wmid_ref[i], preferred_element_type=jnp.float32)
        h = _leaky_relu(h)

    # Output projection.  out_size is tiny (3): per-column broadcast-multiply + lane
    # reduce (VPU + XLU) instead of a lane-sparse MXU matmul that would cost the same
    # MXU pushes as a full 128-wide layer.
    out_size = o_ref.shape[1]
    if out_size <= 16:
        wr = wout_r_ref[...].astype(jnp.float32)                 # (out_size, HP)
        cols = [jnp.sum(h * wr[c:c + 1, :], axis=-1, keepdims=True)
                for c in range(out_size)]
        o_ref[...] = jnp.concatenate(cols, axis=-1).astype(o_ref.dtype)
    else:
        o_ref[...] = jax.lax.dot_general(
            h.astype(od), wout_r_ref[...],
            (((1,), (1,)), ((), ())),
            preferred_element_type=jnp.float32).astype(o_ref.dtype)


def prepare_history_mlp_params(t_history, history, w1_t, wmid_t, wout_t,
                               input_size, operand_dtype=jnp.bfloat16):
    """One-time prep (outside the per-call path): interp tables + lane-padded weights.

    w1_t   : (input_size + 2, hidden)  fc1 weight, pre-transposed; rows are [x..., hist, t]
    wmid_t : (layers, hidden, hidden)  mid Linear weights, pre-transposed
    wout_t : (hidden, out_size)        out Linear weight, pre-transposed
    operand_dtype: dtype of MXU operands (default bf16; accumulation is always f32).
    """
    t_hist = jnp.asarray(t_history, jnp.float32).reshape(-1)
    hist = jnp.asarray(history, jnp.float32).reshape(-1)
    n_int = int(t_hist.shape[0]) - 1
    gp = max(_LANE, _round_up(max(n_int, 1), _LANE))
    left = jnp.zeros((1, gp), jnp.float32)
    invdx = jnp.zeros((1, gp), jnp.float32)
    dh = jnp.zeros((1, gp), jnp.float32)
    if n_int > 0:
        d = t_hist[1:] - t_hist[:-1]
        ok = d > 0            # guard: duplicate / non-increasing knots contribute nothing
        left = left.at[0, :n_int].set(t_hist[:-1])
        invdx = invdx.at[0, :n_int].set(jnp.where(ok, 1.0 / jnp.where(ok, d, 1.0), 0.0))
        dh = dh.at[0, :n_int].set(jnp.where(ok, hist[1:] - hist[:-1], 0.0))
    f0 = hist[0].reshape(1, 1)

    hidden = int(wout_t.shape[0])
    out_size = int(wout_t.shape[1])
    layers = int(wmid_t.shape[0])
    hp = _round_up(hidden, _LANE)        # lane-pad hidden ONCE here, never per call

    w1 = jnp.asarray(w1_t, jnp.float32)
    w1x = jnp.zeros((input_size, hp), jnp.float32).at[:, :hidden].set(w1[:input_size])
    w1h = jnp.zeros((1, hp), jnp.float32).at[:, :hidden].set(w1[input_size:input_size + 1])
    w1tt = jnp.zeros((1, hp), jnp.float32).at[:, :hidden].set(w1[input_size + 1:input_size + 2])
    wmid = jnp.zeros((layers, hp, hp), jnp.float32).at[:, :hidden, :hidden].set(
        jnp.asarray(wmid_t, jnp.float32))
    # Output weight stored row-major over outputs: (out_size, HP).
    wout_rows = jnp.zeros((out_size, hp), jnp.float32).at[:, :hidden].set(
        jnp.asarray(wout_t, jnp.float32).T)

    od = operand_dtype
    # Only cast what actually feeds the MXU; VPU-path weights stay f32 for accuracy.
    w1x = w1x.astype(od) if input_size > 8 else w1x
    wout_rows = wout_rows.astype(od) if out_size > 16 else wout_rows
    return (f0, left, invdx, dh, w1x, w1h, w1tt, wmid.astype(od), wout_rows)


def _resident_spec(shape):
    zeros = (0,) * len(shape)
    return pl.BlockSpec(shape, lambda i: zeros)   # constant block index -> stays VMEM-resident


def _choose_tile_n(n):
    n_pad = _round_up(n, 8)
    if n_pad <= 16:
        return n_pad                      # too small to split across TensorCores
    # >= 2 grid steps so the "parallel" axis shards across v7x's 2 TCs; cap at 8192 rows
    # (big tiles amortize the ~0.35 us/step overhead on v5e/v6e, still << 32 MiB VMEM).
    return min(8192, _round_up(pl.cdiv(n, 2), 8))


@jax.jit
def history_mlp_forward(x, t, params):
    """x: (N, input_size), t: (N, 1), params from prepare_history_mlp_params -> (N, out_size) f32."""
    f0, left, invdx, dh, w1x, w1h, w1tt, wmid, wout_rows = params
    n = x.shape[0]
    dx = x.shape[1]
    out_size = wout_rows.shape[0]

    tile_n = _choose_tile_n(n)
    grid = (pl.cdiv(n, tile_n),)

    in_specs = [
        pl.BlockSpec((tile_n, dx), lambda i: (i, 0)),   # x: pipelined over the batch grid
        pl.BlockSpec((tile_n, 1), lambda i: (i, 0)),    # t: pipelined over the batch grid
    ] + [_resident_spec(p.shape) for p in params]        # interp tables + weights: resident

    return pl.pallas_call(
        history_mlp_kernel,
        out_shape=jax.ShapeDtypeStruct((n, out_size), jnp.float32),
        grid=grid,
        in_specs=in_specs,
        out_specs=pl.BlockSpec((tile_n, out_size), lambda i: (i, 0)),
        compiler_params=pltpu.CompilerParams(
            dimension_semantics=("parallel",),           # v7x: shard batch across both TCs
            vmem_limit_bytes=32 * 1024 * 1024,           # portable budget (v7x has 64 MiB phys)
        ),
    )(x, t, *params)


def _ref_forward(x, t, t_history, history, w1_t, wmid_t, wout_t):
    """Pure-JAX reference of the same forward pass."""
    hist = jnp.interp(t, t_history, history)
    h = jnp.concatenate([x, hist, t], axis=-1) @ w1_t
    h = _leaky_relu(h)
    for i in range(wmid_t.shape[0]):
        h = _leaky_relu(h @ wmid_t[i])
    return h @ wout_t


if __name__ == "__main__":
    # Small shapes consistent with the module:
    #   batch N=64, input_size=4, hidden_size=32, layers=2, out_size=3, history grid T=16
    # N=64 also exercises the >=2-grid-step path (2 tiles of 32 rows).
    N, input_size, hidden_size, layers, out_size = 64, 4, 32, 2, 3
    Din = input_size + 1 + 1                 # x + hist + t

    key = jax.random.PRNGKey(0)
    kx, kt, kh, k1, k2, k3 = jax.random.split(key, 6)

    x = jax.random.normal(kx, (N, input_size), dtype=jnp.float32)
    t = jax.random.uniform(kt, (N, 1), dtype=jnp.float32)        # times in [0, 1)

    # history signal on a fixed time grid (what interp1d(t_history, history) would wrap)
    T = 16
    t_history = jnp.linspace(0.0, 1.0, T)
    history = jnp.sin(2.0 * jnp.pi * t_history) + 0.1 * jax.random.normal(kh, (T,))

    # Deterministic xavier-ish init; weights stored pre-transposed as (in_features, out_features).
    def xavier(k, fan_in, fan_out):
        std = (2.0 / (fan_in + fan_out)) ** 0.5
        return std * jax.random.normal(k, (fan_in, fan_out), dtype=jnp.float32)

    w1_t = xavier(k1, Din, hidden_size)                          # fc1 (bias=False)
    wmid_t = jnp.stack(
        [xavier(kk, hidden_size, hidden_size) for kk in jax.random.split(k2, layers)])
    wout_t = xavier(k3, hidden_size, out_size)                   # out (bias=False)

    ref = _ref_forward(x, t, t_history, history, w1_t, wmid_t, wout_t)

    # Default path: bfloat16 MXU operands, f32 accumulation (the v5e/v6e/v7x win).
    params_bf16 = prepare_history_mlp_params(
        t_history, history, w1_t, wmid_t, wout_t, input_size)    # operand_dtype=bf16 default
    out_bf16 = jax.block_until_ready(history_mlp_forward(x, t, params_bf16))
    assert out_bf16.shape == (N, out_size), out_bf16.shape
    assert jnp.allclose(out_bf16, ref, rtol=5e-2, atol=5e-2), (out_bf16, ref)

    # float32 operands: tight match with the pure-JAX reference.
    params_f32 = prepare_history_mlp_params(
        t_history, history, w1_t, wmid_t, wout_t, input_size, jnp.float32)
    out_f32 = jax.block_until_ready(history_mlp_forward(x, t, params_f32))
    assert out_f32.shape == (N, out_size), out_f32.shape
    assert jnp.allclose(out_f32, ref, rtol=1e-5, atol=1e-5), (out_f32, ref)

    print("KERNEL_OK")
</pallas_src>

<mosaic_0001>
module attributes {stable_mosaic.version = 11 : i64} {
  func.func @history_mlp_kernel(%arg0: i32, %arg1: memref<32x4xf32, #tpu.memory_space<vmem>>, %arg2: memref<32x1xf32, #tpu.memory_space<vmem>>, %arg3: memref<1x1xf32, #tpu.memory_space<vmem>>, %arg4: memref<1x128xf32, #tpu.memory_space<vmem>>, %arg5: memref<1x128xf32, #tpu.memory_space<vmem>>, %arg6: memref<1x128xf32, #tpu.memory_space<vmem>>, %arg7: memref<4x128xf32, #tpu.memory_space<vmem>>, %arg8: memref<1x128xf32, #tpu.memory_space<vmem>>, %arg9: memref<1x128xf32, #tpu.memory_space<vmem>>, %arg10: memref<2x128x128xbf16, #tpu.memory_space<vmem>>, %arg11: memref<3x128xf32, #tpu.memory_space<vmem>>, %arg12: memref<32x3xf32, #tpu.memory_space<vmem>>) attributes {dimension_semantics = [#tpu.dimension_semantics<parallel>], iteration_bounds = array<i64: 2>, scalar_prefetch = 0 : i64, scratch_operands = 0 : i64, tpu.core_type = #tpu.core_type<tc>, window_params = [{transform_indices = @transform_0, window_bounds = array<i64: 32, 4>}, {transform_indices = @transform_1, window_bounds = array<i64: 32, 1>}, {pipeline_mode = #tpu.pipeline_mode<synchronous>, transform_indices = @transform_2, window_bounds = array<i64: 1, 1>}, {pipeline_mode = #tpu.pipeline_mode<synchronous>, transform_indices = @transform_3, window_bounds = array<i64: 1, 128>}, {pipeline_mode = #tpu.pipeline_mode<synchronous>, transform_indices = @transform_4, window_bounds = array<i64: 1, 128>}, {pipeline_mode = #tpu.pipeline_mode<synchronous>, transform_indices = @transform_5, window_bounds = array<i64: 1, 128>}, {pipeline_mode = #tpu.pipeline_mode<synchronous>, transform_indices = @transform_6, window_bounds = array<i64: 4, 128>}, {pipeline_mode = #tpu.pipeline_mode<synchronous>, transform_indices = @transform_7, window_bounds = array<i64: 1, 128>}, {pipeline_mode = #tpu.pipeline_mode<synchronous>, transform_indices = @transform_8, window_bounds = array<i64: 1, 128>}, {pipeline_mode = #tpu.pipeline_mode<synchronous>, transform_indices = @transform_9, window_bounds = array<i64: 2, 128, 128>}, {pipeline_mode = #tpu.pipeline_mode<synchronous>, transform_indices = @transform_10, window_bounds = array<i64: 3, 128>}, {transform_indices = @transform_11, window_bounds = array<i64: 32, 3>}]} {
    %c0 = arith.constant 0 : index
    %c0_0 = arith.constant 0 : index
    %0 = vector.load %arg2[%c0, %c0_0] : memref<32x1xf32, #tpu.memory_space<vmem>>, vector<32x1xf32>
    %c0_1 = arith.constant 0 : index
    %c0_2 = arith.constant 0 : index
    %1 = vector.load %arg4[%c0_1, %c0_2] : memref<1x128xf32, #tpu.memory_space<vmem>>, vector<1x128xf32>
    %2 = vector.broadcast %0 : vector<32x1xf32> to vector<32x128xf32>
    %3 = vector.broadcast %1 : vector<1x128xf32> to vector<32x128xf32>
    %4 = arith.subf %2, %3 : vector<32x128xf32>
    %c0_3 = arith.constant 0 : index
    %c0_4 = arith.constant 0 : index
    %5 = vector.load %arg5[%c0_3, %c0_4] : memref<1x128xf32, #tpu.memory_space<vmem>>, vector<1x128xf32>
    %6 = vector.broadcast %5 : vector<1x128xf32> to vector<32x128xf32>
    %7 = arith.mulf %4, %6 : vector<32x128xf32>
    %cst = arith.constant 0.000000e+00 : f32
    %cst_5 = arith.constant 1.000000e+00 : f32
    %8 = vector.broadcast %cst : f32 to vector<32x128xf32>
    %9 = arith.maximumf %8, %7 : vector<32x128xf32>
    %10 = vector.broadcast %cst_5 : f32 to vector<32x128xf32>
    %11 = arith.minimumf %10, %9 : vector<32x128xf32>
    %c0_6 = arith.constant 0 : index
    %c0_7 = arith.constant 0 : index
    %12 = vector.load %arg3[%c0_6, %c0_7] : memref<1x1xf32, #tpu.memory_space<vmem>>, vector<1x1xf32>
    %c0_8 = arith.constant 0 : index
    %c0_9 = arith.constant 0 : index
    %13 = vector.load %arg6[%c0_8, %c0_9] : memref<1x128xf32, #tpu.memory_space<vmem>>, vector<1x128xf32>
    %14 = vector.broadcast %13 : vector<1x128xf32> to vector<32x128xf32>
    %15 = arith.mulf %11, %14 : vector<32x128xf32>
    %cst_10 = arith.constant dense<0.000000e+00> : vector<32xf32>
    %16 = vector.multi_reduction <add>, %15, %cst_10 [1] : vector<32x128xf32> to vector<32xf32>
    %17 = vector.shape_cast %16 : vector<32xf32> to vector<32x1xf32>
    %18 = vector.broadcast %12 : vector<1x1xf32> to vector<32x1xf32>
    %19 = arith.addf %18, %17 : vector<32x1xf32>
    %c0_11 = arith.constant 0 : index
    %c0_12 = arith.constant 0 : index
    %20 = vector.load %arg8[%c0_11, %c0_12] : memref<1x128xf32, #tpu.memory_space<vmem>>, vector<1x128xf32>
    %21 = vector.broadcast %19 : vector<32x1xf32> to vector<32x128xf32>
    %22 = vector.broadcast %20 : vector<1x128xf32> to vector<32x128xf32>
    %23 = arith.mulf %21, %22 : vector<32x128xf32>
    %c0_13 = arith.constant 0 : index
    %c0_14 = arith.constant 0 : index
    %24 = vector.load %arg9[%c0_13, %c0_14] : memref<1x128xf32, #tpu.memory_space<vmem>>, vector<1x128xf32>
    %25 = vector.broadcast %0 : vector<32x1xf32> to vector<32x128xf32>
    %26 = vector.broadcast %24 : vector<1x128xf32> to vector<32x128xf32>
    %27 = arith.mulf %25, %26 : vector<32x128xf32>
    %28 = arith.addf %23, %27 : vector<32x128xf32>
    %c0_15 = arith.constant 0 : index
    %c0_16 = arith.constant 0 : index
    %29 = vector.load %arg1[%c0_15, %c0_16] : memref<32x4xf32, #tpu.memory_space<vmem>>, vector<32x4xf32>
    %c0_17 = arith.constant 0 : index
    %c0_18 = arith.constant 0 : index
    %30 = vector.load %arg7[%c0_17, %c0_18] : memref<4x128xf32, #tpu.memory_space<vmem>>, vector<4x128xf32>
    %31 = vector.extract_strided_slice %29 {offsets = [0, 0], sizes = [32, 1], strides = [1, 1]} : vector<32x4xf32> to vector<32x1xf32>
    %32 = vector.extract_strided_slice %30 {offsets = [0, 0], sizes = [1, 128], strides = [1, 1]} : vector<4x128xf32> to vector<1x128xf32>
    %33 = vector.broadcast %31 : vector<32x1xf32> to vector<32x128xf32>
    %34 = vector.broadcast %32 : vector<1x128xf32> to vector<32x128xf32>
    %35 = arith.mulf %33, %34 : vector<32x128xf32>
    %36 = arith.addf %28, %35 : vector<32x128xf32>
    %37 = vector.extract_strided_slice %29 {offsets = [0, 1], sizes = [32, 1], strides = [1, 1]} : vector<32x4xf32> to vector<32x1xf32>
    %38 = vector.extract_strided_slice %30 {offsets = [1, 0], sizes = [1, 128], strides = [1, 1]} : vector<4x128xf32> to vector<1x128xf32>
    %39 = vector.broadcast %37 : vector<32x1xf32> to vector<32x128xf32>
    %40 = vector.broadcast %38 : vector<1x128xf32> to vector<32x128xf32>
    %41 = arith.mulf %39, %40 : vector<32x128xf32>
    %42 = arith.addf %36, %41 : vector<32x128xf32>
    %43 = vector.extract_strided_slice %29 {offsets = [0, 2], sizes = [32, 1], strides = [1, 1]} : vector<32x4xf32> to vector<32x1xf32>
    %44 = vector.extract_strided_slice %30 {offsets = [2, 0], sizes = [1, 128], strides = [1, 1]} : vector<4x128xf32> to vector<1x128xf32>
    %45 = vector.broadcast %43 : vector<32x1xf32> to vector<32x128xf32>
    %46 = vector.broadcast %44 : vector<1x128xf32> to vector<32x128xf32>
    %47 = arith.mulf %45, %46 : vector<32x128xf32>
    %48 = arith.addf %42, %47 : vector<32x128xf32>
    %49 = vector.extract_strided_slice %29 {offsets = [0, 3], sizes = [32, 1], strides = [1, 1]} : vector<32x4xf32> to vector<32x1xf32>
    %50 = vector.extract_strided_slice %30 {offsets = [3, 0], sizes = [1, 128], strides = [1, 1]} : vector<4x128xf32> to vector<1x128xf32>
    %51 = vector.broadcast %49 : vector<32x1xf32> to vector<32x128xf32>
    %52 = vector.broadcast %50 : vector<1x128xf32> to vector<32x128xf32>
    %53 = arith.mulf %51, %52 : vector<32x128xf32>
    %54 = arith.addf %48, %53 : vector<32x128xf32>
    %cst_19 = arith.constant 0.00999999977 : f32
    %55 = vector.broadcast %cst_19 : f32 to vector<32x128xf32>
    %56 = arith.mulf %55, %54 : vector<32x128xf32>
    %57 = arith.maximumf %54, %56 : vector<32x128xf32>
    %58 = arith.truncf %57 : vector<32x128xf32> to vector<32x128xbf16>
    %c0_20 = arith.constant 0 : index
    %c0_21 = arith.constant 0 : index
    %c0_22 = arith.constant 0 : index
    %59 = vector.load %arg10[%c0_20, %c0_21, %c0_22] : memref<2x128x128xbf16, #tpu.memory_space<vmem>>, vector<1x128x128xbf16>
    %60 = vector.shape_cast %59 : vector<1x128x128xbf16> to vector<128x128xbf16>
    %cst_23 = arith.constant dense<0.000000e+00> : vector<32x128xf32>
    %61 = tpu.matmul %58, %60, %cst_23 {dimension_numbers = #tpu.dot_dimension_numbers<[1], [0], [0], [1], [0, 0, 1, 1], [], []>} : vector<32x128xbf16>, vector<128x128xbf16>, vector<32x128xf32> -> vector<32x128xf32>
    %cst_24 = arith.constant 0.00999999977 : f32
    %62 = vector.broadcast %cst_24 : f32 to vector<32x128xf32>
    %63 = arith.mulf %62, %61 : vector<32x128xf32>
    %64 = arith.maximumf %61, %63 : vector<32x128xf32>
    %65 = arith.truncf %64 : vector<32x128xf32> to vector<32x128xbf16>
    %c1 = arith.constant 1 : index
    %c0_25 = arith.constant 0 : index
    %c0_26 = arith.constant 0 : index
    %66 = vector.load %arg10[%c1, %c0_25, %c0_26] : memref<2x128x128xbf16, #tpu.memory_space<vmem>>, vector<1x128x128xbf16>
    %67 = vector.shape_cast %66 : vector<1x128x128xbf16> to vector<128x128xbf16>
    %cst_27 = arith.constant dense<0.000000e+00> : vector<32x128xf32>
    %68 = tpu.matmul %65, %67, %cst_27 {dimension_numbers = #tpu.dot_dimension_numbers<[1], [0], [0], [1], [0, 0, 1, 1], [], []>} : vector<32x128xbf16>, vector<128x128xbf16>, vector<32x128xf32> -> vector<32x128xf32>
    %cst_28 = arith.constant 0.00999999977 : f32
    %69 = vector.broadcast %cst_28 : f32 to vector<32x128xf32>
    %70 = arith.mulf %69, %68 : vector<32x128xf32>
    %71 = arith.maximumf %68, %70 : vector<32x128xf32>
    %c0_29 = arith.constant 0 : index
    %c0_30 = arith.constant 0 : index
    %72 = vector.load %arg11[%c0_29, %c0_30] : memref<3x128xf32, #tpu.memory_space<vmem>>, vector<3x128xf32>
    %73 = vector.extract_strided_slice %72 {offsets = [0, 0], sizes = [1, 128], strides = [1, 1]} : vector<3x128xf32> to vector<1x128xf32>
    %74 = vector.broadcast %73 : vector<1x128xf32> to vector<32x128xf32>
    %75 = arith.mulf %71, %74 : vector<32x128xf32>
    %cst_31 = arith.constant dense<0.000000e+00> : vector<32xf32>
    %76 = vector.multi_reduction <add>, %75, %cst_31 [1] : vector<32x128xf32> to vector<32xf32>
    %77 = vector.shape_cast %76 : vector<32xf32> to vector<32x1xf32>
    %78 = vector.extract_strided_slice %72 {offsets = [1, 0], sizes = [1, 128], strides = [1, 1]} : vector<3x128xf32> to vector<1x128xf32>
    %79 = vector.broadcast %78 : vector<1x128xf32> to vector<32x128xf32>
    %80 = arith.mulf %71, %79 : vector<32x128xf32>
    %cst_32 = arith.constant dense<0.000000e+00> : vector<32xf32>
    %81 = vector.multi_reduction <add>, %80, %cst_32 [1] : vector<32x128xf32> to vector<32xf32>
    %82 = vector.shape_cast %81 : vector<32xf32> to vector<32x1xf32>
    %83 = vector.extract_strided_slice %72 {offsets = [2, 0], sizes = [1, 128], strides = [1, 1]} : vector<3x128xf32> to vector<1x128xf32>
    %84 = vector.broadcast %83 : vector<1x128xf32> to vector<32x128xf32>
    %85 = arith.mulf %71, %84 : vector<32x128xf32>
    %cst_33 = arith.constant dense<0.000000e+00> : vector<32xf32>
    %86 = vector.multi_reduction <add>, %85, %cst_33 [1] : vector<32x128xf32> to vector<32xf32>
    %87 = vector.shape_cast %86 : vector<32xf32> to vector<32x1xf32>
    %88 = tpu.concatenate %77, %82, %87 in 1 : vector<32x1xf32>, vector<32x1xf32>, vector<32x1xf32> -> vector<32x3xf32>
    %c0_34 = arith.constant 0 : index
    %c0_35 = arith.constant 0 : index
    %89 = vector.load %arg12[%c0_34, %c0_35] : memref<32x3xf32, #tpu.memory_space<vmem>>, vector<32x3xf32>
    tpu.vector_store %arg12[%c0_34, %c0_35], %88 {strides = array<i32>} : memref<32x3xf32, #tpu.memory_space<vmem>>, vector<32x3xf32>,
    return
  }
  func.func @transform_0(%arg0: i32) -> (i32, i32) {
    %c0_i32 = arith.constant 0 : i32
    %c0_i32_0 = arith.constant 0 : i32
    return %arg0, %c0_i32 : i32, i32
  }
  func.func @transform_1(%arg0: i32) -> (i32, i32) {
    %c0_i32 = arith.constant 0 : i32
    %c0_i32_0 = arith.constant 0 : i32
    return %arg0, %c0_i32 : i32, i32
  }
  func.func @transform_2(%arg0: i32) -> (i32, i32) {
    %c0_i32 = arith.constant 0 : i32
    %c0_i32_0 = arith.constant 0 : i32
    %c0_i32_1 = arith.constant 0 : i32
    return %c0_i32, %c0_i32_0 : i32, i32
  }
  func.func @transform_3(%arg0: i32) -> (i32, i32) {
    %c0_i32 = arith.constant 0 : i32
    %c0_i32_0 = arith.constant 0 : i32
    %c0_i32_1 = arith.constant 0 : i32
    return %c0_i32, %c0_i32_0 : i32, i32
  }
  func.func @transform_4(%arg0: i32) -> (i32, i32) {
    %c0_i32 = arith.constant 0 : i32
    %c0_i32_0 = arith.constant 0 : i32
    %c0_i32_1 = arith.constant 0 : i32
    return %c0_i32, %c0_i32_0 : i32, i32
  }
  func.func @transform_5(%arg0: i32) -> (i32, i32) {
    %c0_i32 = arith.constant 0 : i32
    %c0_i32_0 = arith.constant 0 : i32
    %c0_i32_1 = arith.constant 0 : i32
    return %c0_i32, %c0_i32_0 : i32, i32
  }
  func.func @transform_6(%arg0: i32) -> (i32, i32) {
    %c0_i32 = arith.constant 0 : i32
    %c0_i32_0 = arith.constant 0 : i32
    %c0_i32_1 = arith.constant 0 : i32
    return %c0_i32, %c0_i32_0 : i32, i32
  }
  func.func @transform_7(%arg0: i32) -> (i32, i32) {
    %c0_i32 = arith.constant 0 : i32
    %c0_i32_0 = arith.constant 0 : i32
    %c0_i32_1 = arith.constant 0 : i32
    return %c0_i32, %c0_i32_0 : i32, i32
  }
  func.func @transform_8(%arg0: i32) -> (i32, i32) {
    %c0_i32 = arith.constant 0 : i32
    %c0_i32_0 = arith.constant 0 : i32
    %c0_i32_1 = arith.constant 0 : i32
    return %c0_i32, %c0_i32_0 : i32, i32
  }
  func.func @transform_9(%arg0: i32) -> (i32, i32, i32) {
    %c0_i32 = arith.constant 0 : i32
    %c0_i32_0 = arith.constant 0 : i32
    %c0_i32_1 = arith.constant 0 : i32
    %c0_i32_2 = arith.constant 0 : i32
    return %c0_i32, %c0_i32_0, %c0_i32_1 : i32, i32, i32
  }
  func.func @transform_10(%arg0: i32) -> (i32, i32) {
    %c0_i32 = arith.constant 0 : i32
    %c0_i32_0 = arith.constant 0 : i32
    %c0_i32_1 = arith.constant 0 : i32
    return %c0_i32, %c0_i32_0 : i32, i32
  }
  func.func @transform_11(%arg0: i32) -> (i32, i32) {
    %c0_i32 = arith.constant 0 : i32
    %c0_i32_0 = arith.constant 0 : i32
    return %arg0, %c0_i32 : i32, i32
  }
}

</mosaic_0001>

<llo_original>
// kernel: history_mlp_forward.1
$region0: #{history_mlp_forward.1}
  #allocation0 [shape = 'u32[]', space=smem, size = 0x4, offset = 0x4, fixed_abs, tag = 'smem constant byte address 0x4 - core index']
  #allocation1 [shape = 'u32[72,128]{1,0:T(1,128)}', space=vmem, size = 0x9000, scoped, tag = 'internal scratch']
  #allocation2 [shape = 'f32[1,1]{1,0:T(1,128)S(1)}', space=vmem, size = 0x200, scoped, tag = 'scoped memory for history_mlp_forward.1']
  %s0 = inlined_call_operand.vmem [shape: f32[64,4], index: 0, kind: input, shape index: {}]
  %s1 = inlined_call_operand.vmem [shape: f32[64,1], index: 1, kind: input, shape index: {}]
  %s2 = inlined_call_operand.<no memory space> [shape: f32[1,1], index: 2, kind: input, shape index: {}]
  %s3 = inlined_call_operand.vmem [shape: f32[1,128], index: 3, kind: input, shape index: {}]
  %s4 = inlined_call_operand.hbm [shape: f32[1,128], index: 4, kind: input, shape index: {}]
  %s5 = inlined_call_operand.hbm [shape: f32[1,128], index: 5, kind: input, shape index: {}]
  %s6 = inlined_call_operand.vmem [shape: f32[4,128], index: 6, kind: input, shape index: {}]
  %s7 = inlined_call_operand.vmem [shape: f32[1,128], index: 7, kind: input, shape index: {}]
  %s8 = inlined_call_operand.vmem [shape: f32[1,128], index: 8, kind: input, shape index: {}]
  %s9 = inlined_call_operand.vmem [shape: bf16[2,128,128], index: 9, kind: input, shape index: {}]
  %s10 = inlined_call_operand.vmem [shape: f32[3,128], index: 10, kind: input, shape index: {}]
  %s11 = inlined_call_operand.vmem [shape: f32[64,3], index: 11, kind: output, shape index: {}]
  %s12 = sld [smem:[#allocation0]]
  $region85: #{history_mlp_forward.1} parent=0
    _
  %s14 = ssub.s32 1, %s12
  %s15 = scalar_select 0, %s14, %s12
  %v16 = vstv %s2
  %17 = vst [vmem:[#allocation2] sm:$0x1] %v16
  $region1: #{history_mlp_forward.1} parent=0
    #allocation3 [shape = 'u8[512]{0}', space=vmem, size = 0x400, scoped, tag = 'input window, operand 4, single buffered']
    #allocation4 [shape = 's32[2]{0}', space=sflag, size = 0x8, scoped, tag = 'scoped memory for history_mlp_forward.1']
    #allocation5 [shape = 'u8[512]{0}', space=vmem, size = 0x400, scoped, tag = 'input window, operand 5, single buffered']
    #allocation6 [shape = 's32[1]{0}', space=sflag, size = 0x4, scoped, tag = 'scoped memory for history_mlp_forward.1']
    %18 = vsyncpa [#allocation4], 0
    %19 = vsyncpa [#allocation6], 0
    loop: start=0, step=1, limit=4
    $region2: #{history_mlp_forward.1} parent=1 // loop_pre_header
      _
    $region3: #{history_mlp_forward.1} parent=1 // loop_header
      %s21 = sphi 0, %s25
      %p22 = scmp.ge.s32.totalorder %s21, 4
      %s31 = sphi 0, %s33
      %s34 = sphi 0, %s31
      %s35 = sphi 0, %s34
      %s51 = sphi 0, %s35
      %s57 = sphi 0, %s59
      %s60 = sphi 0, %s57
      %s61 = sphi 0, %s60
      %s77 = sphi 0, %s61
      %s81 = sphi 0, %s81
      %s83 = sphi 0, %s81
      %s84 = sphi 0, %s83
      %s98 = sphi 0, %s84
      %s102 = sphi 0, %s102
      %s104 = sphi 0, %s102
      %s105 = sphi 0, %s104
      %s119 = sphi 0, %s105
      %s123 = sphi 0, %s123
      %s125 = sphi 0, %s123
      %s126 = sphi 0, %s125
      %s140 = sphi 0, %s126
      %s144 = sphi 0, %s144
      %s146 = sphi 0, %s144
      %s147 = sphi 0, %s146
      %s161 = sphi 0, %s147
      %s165 = sphi 0, %s165
      %s167 = sphi 0, %s165
      %s168 = sphi 0, %s167
      %s182 = sphi 0, %s168
      %s186 = sphi 0, %s186
      %s188 = sphi 0, %s186
      %s189 = sphi 0, %s188
      %s203 = sphi 0, %s189
      %s207 = sphi 0, %s207
      %s209 = sphi 0, %s207
      %s210 = sphi 0, %s209
      %s224 = sphi 0, %s210
      %s228 = sphi 0, %s228
      %s230 = sphi 0, %s228
      %s231 = sphi 0, %s230
      %s245 = sphi 0, %s231
      %s249 = sphi 0, %s249
      %s251 = sphi 0, %s249
      %s252 = sphi 0, %s251
      %s266 = sphi 0, %s252
      %s272 = sphi 0, %s274
      %s275 = sphi 0, %s272
      %s276 = sphi 0, %s275
      %s292 = sphi 0, %s276
    $region4: #{history_mlp_forward.1} parent=1 // loop_header_branch
      %24 = sbr.rel (%p22) target = $region8
    $region5: #{history_mlp_forward.1} parent=1 // loop_body
      %s26 = ssub.s32 %s21, 1
      %s27 = ssub.s32 %s21, 2
      %s28 = sadd.s32 %s21, 1
      %s29 = ssub.s32 %s21, %s28
      %p30 = scmp.eq.s32.totalorder %s29, 0
      %s32 = sadd.s32 %s31, 1
      %s33 = scalar_select %p30, %s31, %s32
      %p36 = pneg %p30
      %p37 = scmp.eq.s32.totalorder %s21, 1
      %p38 = por %p36, %p37
      %p39 = scmp.ne.s32.totalorder %s31, %s34
      %p40 = scmp.eq.s32.totalorder %s21, 0
      %p41 = por %p39, %p40
      %p42 = scmp.ne.s32.totalorder %s31, %s34
      %p43 = scmp.eq.s32.totalorder %s26, 1
      %p44 = por %p42, %p43
      %p45 = scmp.ne.s32.totalorder %s34, %s35
      %p46 = scmp.eq.s32.totalorder %s26, 0
      %p47 = por %p45, %p46
      %p48 = scmp.ne.s32.totalorder %s34, %s35
      %p49 = scmp.eq.s32.totalorder %s27, 1
      %p50 = por %p48, %p49
      %p52 = scmp.ne.s32.totalorder %s35, %s51
      %p53 = scmp.eq.s32.totalorder %s27, 0
      %p54 = por %p52, %p53
      %s55 = ssub.s32 %s21, %s28
      %p56 = scmp.eq.s32.totalorder %s55, 0
      %s58 = sadd.s32 %s57, 1
      %s59 = scalar_select %p56, %s57, %s58
      %p62 = pneg %p56
      %p63 = scmp.eq.s32.totalorder %s21, 1
      %p64 = por %p62, %p63
      %p65 = scmp.ne.s32.totalorder %s57, %s60
      %p66 = scmp.eq.s32.totalorder %s21, 0
      %p67 = por %p65, %p66
      %p68 = scmp.ne.s32.totalorder %s57, %s60
      %p69 = scmp.eq.s32.totalorder %s26, 1
      %p70 = por %p68, %p69
      %p71 = scmp.ne.s32.totalorder %s60, %s61
      %p72 = scmp.eq.s32.totalorder %s26, 0
      %p73 = por %p71, %p72
      %p74 = scmp.ne.s32.totalorder %s60, %s61
      %p75 = scmp.eq.s32.totalorder %s27, 1
      %p76 = por %p74, %p75
      %p78 = scmp.ne.s32.totalorder %s61, %s77
      %p79 = scmp.eq.s32.totalorder %s27, 0
      %p80 = por %p78, %p79
      %s82 = sadd.s32 %s81, 1
      %p85 = scmp.eq.s32.totalorder %s21, 1
      %p86 = scmp.ne.s32.totalorder %s81, %s83
      %p87 = scmp.eq.s32.totalorder %s21, 0
      %p88 = por %p86, %p87
      %p89 = scmp.ne.s32.totalorder %s81, %s83
      %p90 = scmp.eq.s32.totalorder %s26, 1
      %p91 = por %p89, %p90
      %p92 = scmp.ne.s32.totalorder %s83, %s84
      %p93 = scmp.eq.s32.totalorder %s26, 0
      %p94 = por %p92, %p93
      %p95 = scmp.ne.s32.totalorder %s83, %s84
      %p96 = scmp.eq.s32.totalorder %s27, 1
      %p97 = por %p95, %p96
      %p99 = scmp.ne.s32.totalorder %s84, %s98
      %p100 = scmp.eq.s32.totalorder %s27, 0
      %p101 = por %p99, %p100
      %s103 = sadd.s32 %s102, 1
      %p106 = scmp.eq.s32.totalorder %s21, 1
      %p107 = scmp.ne.s32.totalorder %s102, %s104
      %p108 = scmp.eq.s32.totalorder %s21, 0
      %p109 = por %p107, %p108
      %p110 = scmp.ne.s32.totalorder %s102, %s104
      %p111 = scmp.eq.s32.totalorder %s26, 1
      %p112 = por %p110, %p111
      %p113 = scmp.ne.s32.totalorder %s104, %s105
      %p114 = scmp.eq.s32.totalorder %s26, 0
      %p115 = por %p113, %p114
      %p116 = scmp.ne.s32.totalorder %s104, %s105
      %p117 = scmp.eq.s32.totalorder %s27, 1
      %p118 = por %p116, %p117
      %p120 = scmp.ne.s32.totalorder %s105, %s119
      %p121 = scmp.eq.s32.totalorder %s27, 0
      %p122 = por %p120, %p121
      %s124 = sadd.s32 %s123, 1
      %p127 = scmp.eq.s32.totalorder %s21, 1
      %p128 = scmp.ne.s32.totalorder %s123, %s125
      %p129 = scmp.eq.s32.totalorder %s21, 0
      %p130 = por %p128, %p129
      %p131 = scmp.ne.s32.totalorder %s123, %s125
      %p132 = scmp.eq.s32.totalorder %s26, 1
      %p133 = por %p131, %p132
      %p134 = scmp.ne.s32.totalorder %s125, %s126
      %p135 = scmp.eq.s32.totalorder %s26, 0
      %p136 = por %p134, %p135
      %p137 = scmp.ne.s32.totalorder %s125, %s126
      %p138 = scmp.eq.s32.totalorder %s27, 1
      %p139 = por %p137, %p138
      %p141 = scmp.ne.s32.totalorder %s126, %s140
      %p142 = scmp.eq.s32.totalorder %s27, 0
      %p143 = por %p141, %p142
      %s145 = sadd.s32 %s144, 1
      %p148 = scmp.eq.s32.totalorder %s21, 1
      %p149 = scmp.ne.s32.totalorder %s144, %s146
      %p150 = scmp.eq.s32.totalorder %s21, 0
      %p151 = por %p149, %p150
      %p152 = scmp.ne.s32.totalorder %s144, %s146
      %p153 = scmp.eq.s32.totalorder %s26, 1
      %p154 = por %p152, %p153
      %p155 = scmp.ne.s32.totalorder %s146, %s147
      %p156 = scmp.eq.s32.totalorder %s26, 0
      %p157 = por %p155, %p156
      %p158 = scmp.ne.s32.totalorder %s146, %s147
      %p159 = scmp.eq.s32.totalorder %s27, 1
      %p160 = por %p158, %p159
      %p162 = scmp.ne.s32.totalorder %s147, %s161
      %p163 = scmp.eq.s32.totalorder %s27, 0
      %p164 = por %p162, %p163
      %s166 = sadd.s32 %s165, 1
      %p169 = scmp.eq.s32.totalorder %s21, 1
      %p170 = scmp.ne.s32.totalorder %s165, %s167
      %p171 = scmp.eq.s32.totalorder %s21, 0
      %p172 = por %p170, %p171
      %p173 = scmp.ne.s32.totalorder %s165, %s167
      %p174 = scmp.eq.s32.totalorder %s26, 1
      %p175 = por %p173, %p174
      %p176 = scmp.ne.s32.totalorder %s167, %s168
      %p177 = scmp.eq.s32.totalorder %s26, 0
      %p178 = por %p176, %p177
      %p179 = scmp.ne.s32.totalorder %s167, %s168
      %p180 = scmp.eq.s32.totalorder %s27, 1
      %p181 = por %p179, %p180
      %p183 = scmp.ne.s32.totalorder %s168, %s182
      %p184 = scmp.eq.s32.totalorder %s27, 0
      %p185 = por %p183, %p184
      %s187 = sadd.s32 %s186, 1
      %p190 = scmp.eq.s32.totalorder %s21, 1
      %p191 = scmp.ne.s32.totalorder %s186, %s188
      %p192 = scmp.eq.s32.totalorder %s21, 0
      %p193 = por %p191, %p192
      %p194 = scmp.ne.s32.totalorder %s186, %s188
      %p195 = scmp.eq.s32.totalorder %s26, 1
      %p196 = por %p194, %p195
      %p197 = scmp.ne.s32.totalorder %s188, %s189
      %p198 = scmp.eq.s32.totalorder %s26, 0
      %p199 = por %p197, %p198
      %p200 = scmp.ne.s32.totalorder %s188, %s189
      %p201 = scmp.eq.s32.totalorder %s27, 1
      %p202 = por %p200, %p201
      %p204 = scmp.ne.s32.totalorder %s189, %s203
      %p205 = scmp.eq.s32.totalorder %s27, 0
      %p206 = por %p204, %p205
      %s208 = sadd.s32 %s207, 1
      %p211 = scmp.eq.s32.totalorder %s21, 1
      %p212 = scmp.ne.s32.totalorder %s207, %s209
      %p213 = scmp.eq.s32.totalorder %s21, 0
      %p214 = por %p212, %p213
      %p215 = scmp.ne.s32.totalorder %s207, %s209
      %p216 = scmp.eq.s32.totalorder %s26, 1
      %p217 = por %p215, %p216
      %p218 = scmp.ne.s32.totalorder %s209, %s210
      %p219 = scmp.eq.s32.totalorder %s26, 0
      %p220 = por %p218, %p219
      %p221 = scmp.ne.s32.totalorder %s209, %s210
      %p222 = scmp.eq.s32.totalorder %s27, 1
      %p223 = por %p221, %p222
      %p225 = scmp.ne.s32.totalorder %s210, %s224
      %p226 = scmp.eq.s32.totalorder %s27, 0
      %p227 = por %p225, %p226
      %s229 = sadd.s32 %s228, 1
      %p232 = scmp.eq.s32.totalorder %s21, 1
      %p233 = scmp.ne.s32.totalorder %s228, %s230
      %p234 = scmp.eq.s32.totalorder %s21, 0
      %p235 = por %p233, %p234
      %p236 = scmp.ne.s32.totalorder %s228, %s230
      %p237 = scmp.eq.s32.totalorder %s26, 1
      %p238 = por %p236, %p237
      %p239 = scmp.ne.s32.totalorder %s230, %s231
      %p240 = scmp.eq.s32.totalorder %s26, 0
      %p241 = por %p239, %p240
      %p242 = scmp.ne.s32.totalorder %s230, %s231
      %p243 = scmp.eq.s32.totalorder %s27, 1
      %p244 = por %p242, %p243
      %p246 = scmp.ne.s32.totalorder %s231, %s245
      %p247 = scmp.eq.s32.totalorder %s27, 0
      %p248 = por %p246, %p247
      %s250 = sadd.s32 %s249, 1
      %p253 = scmp.eq.s32.totalorder %s21, 1
      %p254 = scmp.ne.s32.totalorder %s249, %s251
      %p255 = scmp.eq.s32.totalorder %s21, 0
      %p256 = por %p254, %p255
      %p257 = scmp.ne.s32.totalorder %s249, %s251
      %p258 = scmp.eq.s32.totalorder %s26, 1
      %p259 = por %p257, %p258
      %p260 = scmp.ne.s32.totalorder %s251, %s252
      %p261 = scmp.eq.s32.totalorder %s26, 0
      %p262 = por %p260, %p261
      %p263 = scmp.ne.s32.totalorder %s251, %s252
      %p264 = scmp.eq.s32.totalorder %s27, 1
      %p265 = por %p263, %p264
      %p267 = scmp.ne.s32.totalorder %s252, %s266
      %p268 = scmp.eq.s32.totalorder %s27, 0
      %p269 = por %p267, %p268
      %s270 = ssub.s32 %s21, %s28
      %p271 = scmp.eq.s32.totalorder %s270, 0
      %s273 = sadd.s32 %s272, 1
      %s274 = scalar_select %p271, %s272, %s273
      %p277 = pneg %p271
      %p278 = scmp.eq.s32.totalorder %s21, 1
      %p279 = por %p277, %p278
      %p280 = scmp.ne.s32.totalorder %s272, %s275
      %p281 = scmp.eq.s32.totalorder %s21, 0
      %p282 = por %p280, %p281
      %p283 = scmp.ne.s32.totalorder %s272, %s275
      %p284 = scmp.eq.s32.totalorder %s26, 1
      %p285 = por %p283, %p284
      %p286 = scmp.ne.s32.totalorder %s275, %s276
      %p287 = scmp.eq.s32.totalorder %s26, 0
      %p288 = por %p286, %p287
      %p289 = scmp.ne.s32.totalorder %s275, %s276
      %p290 = scmp.eq.s32.totalorder %s27, 1
      %p291 = por %p289, %p290
      %p293 = scmp.ne.s32.totalorder %s276, %s292
      %p294 = scmp.eq.s32.totalorder %s27, 0
      %p295 = por %p293, %p294
      %p296 = scmp.le.s32.totalorder 1, %s21
      %p297 = scmp.lt.s32.totalorder %s21, 3
      %p298 = pnand %p296, %p297
      %p299 = pneg %p298
      // Predicated region
      $region9: #{history_mlp_forward.1} parent=5 // pred_check
        _
      $region10: #{history_mlp_forward.1} parent=5 // pred_check_branch
        %301 = sbr.rel (%p298) target = $region12
      $region11: #{history_mlp_forward.1} parent=5 // pred_region
        %s302 = ssub.s32 %s21, 1
        // Predicated region
        $region13: #{history_mlp_forward.1} parent=11 // pred_check
          %p303 = pneg %p94
        $region14: #{history_mlp_forward.1} parent=11 // pred_check_branch
          %305 = sbr.rel (%p303) target = $region16
        $region15: #{history_mlp_forward.1} parent=11 // pred_region
          _
        $region16: #{history_mlp_forward.1} parent=11 // pred_fallthru
          _
        // Predicated region
        $region17: #{history_mlp_forward.1} parent=11 // pred_check
          %p306 = pneg %p115
        $region18: #{history_mlp_forward.1} parent=11 // pred_check_branch
          %308 = sbr.rel (%p306) target = $region20
        $region19: #{history_mlp_forward.1} parent=11 // pred_region
          _
        $region20: #{history_mlp_forward.1} parent=11 // pred_fallthru
          _
        // Predicated region
        $region21: #{history_mlp_forward.1} parent=11 // pred_check
          %p309 = pneg %p136
        $region22: #{history_mlp_forward.1} parent=11 // pred_check_branch
          %311 = sbr.rel (%p309) target = $region24
        $region23: #{history_mlp_forward.1} parent=11 // pred_region
          %313 = vsyncadd [#allocation4], 0
          %s315 = sshll.u32 %s4, 4
          %s316 = int_to_ptr.hbm [resolvable:$true] %s315
          %s317 = sshll.u32 [#allocation3], 4
          %s318 = int_to_ptr.vmem [resolvable:$true] %s317
          %320 = dma.hbm_to_vmem [thread:$0]  %s316, 16, %s318, [#allocation4]
        $region24: #{history_mlp_forward.1} parent=11 // pred_fallthru
          _
        // Predicated region
        $region25: #{history_mlp_forward.1} parent=11 // pred_check
          %p321 = pneg %p157
        $region26: #{history_mlp_forward.1} parent=11 // pred_check_branch
          %323 = sbr.rel (%p321) target = $region28
        $region27: #{history_mlp_forward.1} parent=11 // pred_region
          %325 = vsyncadd [#allocation6], 0
          %s327 = sshll.u32 %s5, 4
          %s328 = int_to_ptr.hbm [resolvable:$true] %s327
          %s329 = sshll.u32 [#allocation5], 4
          %s330 = int_to_ptr.vmem [resolvable:$true] %s329
          %332 = dma.hbm_to_vmem [thread:$0]  %s328, 16, %s330, [#allocation6]
        $region28: #{history_mlp_forward.1} parent=11 // pred_fallthru
          _
        // Predicated region
        $region29: #{history_mlp_forward.1} parent=11 // pred_check
          %p333 = pneg %p178
        $region30: #{history_mlp_forward.1} parent=11 // pred_check_branch
          %335 = sbr.rel (%p333) target = $region32
        $region31: #{history_mlp_forward.1} parent=11 // pred_region
          _
        $region32: #{history_mlp_forward.1} parent=11 // pred_fallthru
          _
        // Predicated region
        $region33: #{history_mlp_forward.1} parent=11 // pred_check
          %p336 = pneg %p199
        $region34: #{history_mlp_forward.1} parent=11 // pred_check_branch
          %338 = sbr.rel (%p336) target = $region36
        $region35: #{history_mlp_forward.1} parent=11 // pred_region
          _
        $region36: #{history_mlp_forward.1} parent=11 // pred_fallthru
          _
        // Predicated region
        $region37: #{history_mlp_forward.1} parent=11 // pred_check
          %p339 = pneg %p220
        $region38: #{history_mlp_forward.1} parent=11 // pred_check_branch
          %341 = sbr.rel (%p339) target = $region40
        $region39: #{history_mlp_forward.1} parent=11 // pred_region
          _
        $region40: #{history_mlp_forward.1} parent=11 // pred_fallthru
          _
        // Predicated region
        $region41: #{history_mlp_forward.1} parent=11 // pred_check
          %p342 = pneg %p241
        $region42: #{history_mlp_forward.1} parent=11 // pred_check_branch
          %344 = sbr.rel (%p342) target = $region44
        $region43: #{history_mlp_forward.1} parent=11 // pred_region
          _
        $region44: #{history_mlp_forward.1} parent=11 // pred_fallthru
          _
        // Predicated region
        $region45: #{history_mlp_forward.1} parent=11 // pred_check
          %p345 = pneg %p262
        $region46: #{history_mlp_forward.1} parent=11 // pred_check_branch
          %347 = sbr.rel (%p345) target = $region48
        $region47: #{history_mlp_forward.1} parent=11 // pred_region
          _
        $region48: #{history_mlp_forward.1} parent=11 // pred_fallthru
          _
      $region12: #{history_mlp_forward.1} parent=5 // pred_fallthru
        _
      %p348 = scmp.lt.s32.totalorder %s21, 2
      // Predicated region
      $region49: #{history_mlp_forward.1} parent=5 // pred_check
        %p349 = pneg %p348
      $region50: #{history_mlp_forward.1} parent=5 // pred_check_branch
        %351 = sbr.rel (%p349) target = $region52
      $region51: #{history_mlp_forward.1} parent=5 // pred_region
        // Predicated region
        $region53: #{history_mlp_forward.1} parent=51 // pred_check
          %p352 = pneg %p41
        $region54: #{history_mlp_forward.1} parent=51 // pred_check_branch
          %354 = sbr.rel (%p352) target = $region56
        $region55: #{history_mlp_forward.1} parent=51 // pred_region
          %s355 = smul.u32 4, %s21
          %p356 = scmp.lt.s32.totalorder %s355, 7
          %s357 = scalar_select %p356, %s355, 7
          %s358 = smul.addr %s357, 8
          %s359 = scalar_lea.vmem %s0, %s358
          %s360 = smul.u32 4, %s21
        $region56: #{history_mlp_forward.1} parent=51 // pred_fallthru
          _
        // Predicated region
        $region57: #{history_mlp_forward.1} parent=51 // pred_check
          %p361 = pneg %p67
        $region58: #{history_mlp_forward.1} parent=51 // pred_check_branch
          %363 = sbr.rel (%p361) target = $region60
        $region59: #{history_mlp_forward.1} parent=51 // pred_region
          %s364 = smul.u32 4, %s21
          %p365 = scmp.lt.s32.totalorder %s364, 7
          %s366 = scalar_select %p365, %s364, 7
          %s367 = smul.addr %s366, 8
          %s368 = scalar_lea.vmem %s1, %s367
          %s369 = smul.u32 4, %s21
        $region60: #{history_mlp_forward.1} parent=51 // pred_fallthru
          _
      $region52: #{history_mlp_forward.1} parent=5 // pred_fallthru
        _
      %p370 = scmp.le.s32.totalorder 1, %s21
      %p371 = scmp.lt.s32.totalorder %s21, 3
      %p372 = pnand %p370, %p371
      %p373 = pneg %p372
      // Predicated region
      $region61: #{history_mlp_forward.1} parent=5 // pred_check
        _
      $region62: #{history_mlp_forward.1} parent=5 // pred_check_branch
        %375 = sbr.rel (%p372) target = $region64
      $region63: #{history_mlp_forward.1} parent=5 // pred_region
        %s376 = ssub.s32 %s21, 1
        // Predicated region
        $region65: #{history_mlp_forward.1} parent=63 // pred_check
          %p377 = pneg %p136
        $region66: #{history_mlp_forward.1} parent=63 // pred_check_branch
          %379 = sbr.rel (%p377) target = $region68
        $region67: #{history_mlp_forward.1} parent=63 // pred_region
          %381 = dma.done [#allocation4], 16
        $region68: #{history_mlp_forward.1} parent=63 // pred_fallthru
          _
        // Predicated region
        $region69: #{history_mlp_forward.1} parent=63 // pred_check
          %p382 = pneg %p157
        $region70: #{history_mlp_forward.1} parent=63 // pred_check_branch
          %384 = sbr.rel (%p382) target = $region72
        $region71: #{history_mlp_forward.1} parent=63 // pred_region
          %386 = dma.done [#allocation6], 16
        $region72: #{history_mlp_forward.1} parent=63 // pred_fallthru
          _
        %s387 = smul.u32 4, %s26
        %p388 = scmp.lt.s32.totalorder %s387, 7
        %s389 = scalar_select %p388, %s387, 7
        %s390 = smul.addr %s389, 8
        %s391 = scalar_lea.vmem %s0, %s390
        %p392 = pneg %p47
        %p393 = pneg %p44
        %s394 = smul.u32 4, %s26
        %p395 = scmp.lt.s32.totalorder %s394, 7
        %s396 = scalar_select %p395, %s394, 7
        %s397 = smul.addr %s396, 8
        %s398 = scalar_lea.vmem %s1, %s397
        %p399 = pneg %p73
        %p400 = pneg %p70
        %p401 = pneg %p94
        %p402 = pneg %p91
        %p403 = pneg %p115
        %p404 = pneg %p112
        %p405 = pneg %p136
        %p406 = pneg %p133
        %p407 = pneg %p157
        %p408 = pneg %p154
        %p409 = pneg %p178
        %p410 = pneg %p175
        %p411 = pneg %p199
        %p412 = pneg %p196
        %p413 = pneg %p220
        %p414 = pneg %p217
        %p415 = pneg %p241
        %p416 = pneg %p238
        %p417 = pneg %p262
        %p418 = pneg %p259
        %p419 = pneg %p288
        %p420 = pneg %p285
        %s421 = smul.u32 4, %s26
        %p422 = scmp.lt.s32.totalorder %s421, 7
        %s423 = scalar_select %p422, %s421, 7
        %s424 = smul.addr %s423, 8
        %s425 = scalar_lea.vmem %s11, %s424
        %s426 = smul.u32 4, %s26
        %p427 = scmp.lt.s32.totalorder %s426, 7
        %s428 = scalar_select %p427, %s426, 7
        %s429 = smul.addr %s428, 8
        %s430 = scalar_lea.vmem %s0, %s429
        %s431 = smul.u32 4, %s26
        %s432 = smul.u32 4, %s26
        %p433 = scmp.lt.s32.totalorder %s432, 7
        %s434 = scalar_select %p433, %s432, 7
        %s435 = smul.addr %s434, 8
        %s436 = scalar_lea.vmem %s1, %s435
        %s437 = smul.u32 4, %s26
        %s438 = smul.u32 4, %s26
        %p439 = scmp.lt.s32.totalorder %s438, 7
        %s440 = scalar_select %p439, %s438, 7
        %s441 = smul.addr %s440, 8
        %s442 = scalar_lea.vmem %s11, %s441
        %s443 = smul.u32 4, %s26
        %v444 = vld [vmem:[%s436] sm:$0xff]
        %v445 = vld [vmem:[%s436 + $0x8] sm:$0xff]
        %v446 = vld [vmem:[%s436 + $0x10] sm:$0xff]
        %v447 = vld [vmem:[%s436 + $0x18] sm:$0xff]
        %v448 = vld [vmem:[%s3] sm:$0x1]
        %450 = vset.pattern.permute.xlu0 0
        %451 = vperm.xlu0 %450, %v444
        %v452 = vpop.permute.xlu0 %451
        %455 = vset.pattern.permute.xlu0 0
        %456 = vperm.xlu0 %455, %v445
        %v457 = vpop.permute.xlu0 %456
        %460 = vset.pattern.permute.xlu0 0
        %461 = vperm.xlu0 %460, %v446
        %v462 = vpop.permute.xlu0 %461
        %465 = vset.pattern.permute.xlu0 0
        %466 = vperm.xlu0 %465, %v447
        %v467 = vpop.permute.xlu0 %466
        %v470 = vperm.slane %v448, 0
        %v472 = vsub.f32 %v452, %v470
        %v473 = vsub.f32 %v457, %v470
        %v474 = vsub.f32 %v462, %v470
        %v475 = vsub.f32 %v467, %v470
        %v476 = vld [vmem:[#allocation3] sm:$0x1]
        %v478 = vperm.slane %v476, 0
        %v480 = vmul.f32 %v472, %v478
        %v481 = vmul.f32 %v473, %v478
        %v482 = vmul.f32 %v474, %v478
        %v483 = vmul.f32 %v475, %v478
        %v484 = vmax.f32 %v480, 0.0
        %v485 = vmax.f32 %v481, 0.0
        %v486 = vmax.f32 %v482, 0.0
        %v487 = vmax.f32 %v483, 0.0
        %v488 = vmin.f32 %v484, 1.0
        %v489 = vmin.f32 %v485, 1.0
        %v490 = vmin.f32 %v486, 1.0
        %v491 = vmin.f32 %v487, 1.0
        %v492 = vld [vmem:[#allocation2] sm:$0x1]
        %v493 = vld [vmem:[#allocation5] sm:$0x1]
        %v495 = vperm.slane %v493, 0
        %v497 = vmul.f32 %v488, %v495
        %v498 = vmul.f32 %v489, %v495
        %v499 = vmul.f32 %v490, %v495
        %v500 = vmul.f32 %v491, %v495
        %501 = vadd.xlane.f32.xlu0 %v497
        %v502 = vpop.xlane.xlu0 %501
        %503 = vadd.xlane.f32.xlu0 %v498
        %v504 = vpop.xlane.xlu0 %503
        %505 = vadd.xlane.f32.xlu0 %v499
        %v506 = vpop.xlane.xlu0 %505
        %507 = vadd.xlane.f32.xlu0 %v500
        %v508 = vpop.xlane.xlu0 %507
        %v510 = vperm.slane %v492, 0
        %v512 = vadd.f32 %v510, %v502
        %v513 = vadd.f32 %v510, %v504
        %v514 = vadd.f32 %v510, %v506
        %v515 = vadd.f32 %v510, %v508
        %v516 = vld [vmem:[%s7] sm:$0x1]
        %518 = vset.pattern.permute.xlu0 0
        %519 = vperm.xlu0 %518, %v512
        %v520 = vpop.permute.xlu0 %519
        %523 = vset.pattern.permute.xlu0 0
        %524 = vperm.xlu0 %523, %v513
        %v525 = vpop.permute.xlu0 %524
        %528 = vset.pattern.permute.xlu0 0
        %529 = vperm.xlu0 %528, %v514
        %v530 = vpop.permute.xlu0 %529
        %533 = vset.pattern.permute.xlu0 0
        %534 = vperm.xlu0 %533, %v515
        %v535 = vpop.permute.xlu0 %534
        %v538 = vperm.slane %v516, 0
        %v540 = vmul.f32 %v520, %v538
        %v541 = vmul.f32 %v525, %v538
        %v542 = vmul.f32 %v530, %v538
        %v543 = vmul.f32 %v535, %v538
        %v544 = vld [vmem:[%s8] sm:$0x1]
        %v546 = vperm.slane %v544, 0
        %v548 = vmul.f32 %v452, %v546
        %v549 = vmul.f32 %v457, %v546
        %v550 = vmul.f32 %v462, %v546
        %v551 = vmul.f32 %v467, %v546
        %v552 = vadd.f32 %v540, %v548
        %v553 = vadd.f32 %v541, %v549
        %v554 = vadd.f32 %v542, %v550
        %v555 = vadd.f32 %v543, %v551
        %v556 = vld [vmem:[%s430] sm:$0xff]
        %v557 = vld [vmem:[%s430 + $0x8] sm:$0xff]
        %v558 = vld [vmem:[%s430 + $0x10] sm:$0xff]
        %v559 = vld [vmem:[%s430 + $0x18] sm:$0xff]
        %v560 = vld [vmem:[%s6] sm:$0xf]
        %562 = vset.pattern.permute.xlu0 0
        %563 = vperm.xlu0 %562, %v556
        %v564 = vpop.permute.xlu0 %563
        %567 = vset.pattern.permute.xlu0 0
        %568 = vperm.xlu0 %567, %v557
        %v569 = vpop.permute.xlu0 %568
        %572 = vset.pattern.permute.xlu0 0
        %573 = vperm.xlu0 %572, %v558
        %v574 = vpop.permute.xlu0 %573
        %577 = vset.pattern.permute.xlu0 0
        %578 = vperm.xlu0 %577, %v559
        %v579 = vpop.permute.xlu0 %578
        %v581 = vperm.slane %v560, 0
        %v582 = vmul.f32 %v564, %v581
        %v583 = vmul.f32 %v569, %v581
        %v584 = vmul.f32 %v574, %v581
        %v585 = vmul.f32 %v579, %v581
        %v586 = vadd.f32 %v552, %v582
        %v587 = vadd.f32 %v553, %v583
        %v588 = vadd.f32 %v554, %v584
        %v589 = vadd.f32 %v555, %v585
        %590 = vset.pattern.permute.xlu0 1
        %591 = vperm.xlu0 %590, %v556
        %v592 = vpop.permute.xlu0 %591
        %594 = vset.pattern.permute.xlu0 1
        %595 = vperm.xlu0 %594, %v557
        %v596 = vpop.permute.xlu0 %595
        %598 = vset.pattern.permute.xlu0 1
        %599 = vperm.xlu0 %598, %v558
        %v600 = vpop.permute.xlu0 %599
        %602 = vset.pattern.permute.xlu0 1
        %603 = vperm.xlu0 %602, %v559
        %v604 = vpop.permute.xlu0 %603
        %v606 = vperm.slane %v560, 1
        %v607 = vmul.f32 %v592, %v606
        %v608 = vmul.f32 %v596, %v606
        %v609 = vmul.f32 %v600, %v606
        %v610 = vmul.f32 %v604, %v606
        %v611 = vadd.f32 %v586, %v607
        %v612 = vadd.f32 %v587, %v608
        %v613 = vadd.f32 %v588, %v609
        %v614 = vadd.f32 %v589, %v610
        %615 = vset.pattern.permute.xlu0 2
        %616 = vperm.xlu0 %615, %v556
        %v617 = vpop.permute.xlu0 %616
        %619 = vset.pattern.permute.xlu0 2
        %620 = vperm.xlu0 %619, %v557
        %v621 = vpop.permute.xlu0 %620
        %623 = vset.pattern.permute.xlu0 2
        %624 = vperm.xlu0 %623, %v558
        %v625 = vpop.permute.xlu0 %624
        %627 = vset.pattern.permute.xlu0 2
        %628 = vperm.xlu0 %627, %v559
        %v629 = vpop.permute.xlu0 %628
        %v631 = vperm.slane %v560, 2
        %v632 = vmul.f32 %v617, %v631
        %v633 = vmul.f32 %v621, %v631
        %v634 = vmul.f32 %v625, %v631
        %v635 = vmul.f32 %v629, %v631
        %v636 = vadd.f32 %v611, %v632
        %v637 = vadd.f32 %v612, %v633
        %v638 = vadd.f32 %v613, %v634
        %v639 = vadd.f32 %v614, %v635
        %640 = vset.pattern.permute.xlu0 3
        %641 = vperm.xlu0 %640, %v556
        %v642 = vpop.permute.xlu0 %641
        %644 = vset.pattern.permute.xlu0 3
        %645 = vperm.xlu0 %644, %v557
        %v646 = vpop.permute.xlu0 %645
        %648 = vset.pattern.permute.xlu0 3
        %649 = vperm.xlu0 %648, %v558
        %v650 = vpop.permute.xlu0 %649
        %652 = vset.pattern.permute.xlu0 3
        %653 = vperm.xlu0 %652, %v559
        %v654 = vpop.permute.xlu0 %653
        %v656 = vperm.slane %v560, 3
        %v657 = vmul.f32 %v642, %v656
        %v658 = vmul.f32 %v646, %v656
        %v659 = vmul.f32 %v650, %v656
        %v660 = vmul.f32 %v654, %v656
        %v661 = vadd.f32 %v636, %v657
        %v662 = vadd.f32 %v637, %v658
        %v663 = vadd.f32 %v638, %v659
        %v664 = vadd.f32 %v639, %v660
        %v665 = vmul.f32 %v661, 0.01
        %v666 = vmul.f32 %v662, 0.01
        %v667 = vmul.f32 %v663, 0.01
        %v668 = vmul.f32 %v664, 0.01
        %v669 = vmax.f32 %v661, %v665
        %v670 = vmax.f32 %v662, %v666
        %v671 = vmax.f32 %v663, %v667
        %v672 = vmax.f32 %v664, %v668
        %v673 = vpack.c.bf16 %v670, %v669
        %v674 = vpack.c.bf16 %v672, %v671
        %v675 = vld [vmem:[%s9] sm:$0xf]
        %v676 = vld [vmem:[%s9 + $0x4] sm:$0xf]
        %v677 = vld [vmem:[%s9 + $0x8] sm:$0xf]
        %v678 = vld [vmem:[%s9 + $0xc] sm:$0xf]
        %v679 = vld [vmem:[%s9 + $0x10] sm:$0xf]
        %v680 = vld [vmem:[%s9 + $0x14] sm:$0xf]
        %v681 = vld [vmem:[%s9 + $0x18] sm:$0xf]
        %v682 = vld [vmem:[%s9 + $0x1c] sm:$0xf]
        %v683 = vld [vmem:[%s9 + $0x20] sm:$0xf]
        %v684 = vld [vmem:[%s9 + $0x24] sm:$0xf]
        %v685 = vld [vmem:[%s9 + $0x28] sm:$0xf]
        %v686 = vld [vmem:[%s9 + $0x2c] sm:$0xf]
        %v687 = vld [vmem:[%s9 + $0x30] sm:$0xf]
        %v688 = vld [vmem:[%s9 + $0x34] sm:$0xf]
        %v689 = vld [vmem:[%s9 + $0x38] sm:$0xf]
        %v690 = vld [vmem:[%s9 + $0x3c] sm:$0xf]
        %v707 = vunpack.c.l.b16 %v675
        %v708 = vunpack.c.l.b16 %v676
        %v709 = vunpack.c.l.b16 %v677
        %v710 = vunpack.c.l.b16 %v678
        %v711 = vunpack.c.l.b16 %v679
        %v712 = vunpack.c.l.b16 %v680
        %v713 = vunpack.c.l.b16 %v681
        %v714 = vunpack.c.l.b16 %v682
        %v715 = vunpack.c.l.b16 %v683
        %v716 = vunpack.c.l.b16 %v684
        %v717 = vunpack.c.l.b16 %v685
        %v718 = vunpack.c.l.b16 %v686
        %v719 = vunpack.c.l.b16 %v687
        %v720 = vunpack.c.l.b16 %v688
        %v721 = vunpack.c.l.b16 %v689
        %v722 = vunpack.c.l.b16 %v690
        %v723 = vpack.c.b16 %v708, %v707
        %v724 = vpack.c.b16 %v710, %v709
        %v725 = vpack.c.b16 %v712, %v711
        %v726 = vpack.c.b16 %v714, %v713
        %v727 = vpack.c.b16 %v716, %v715
        %v728 = vpack.c.b16 %v718, %v717
        %v729 = vpack.c.b16 %v720, %v719
        %v730 = vpack.c.b16 %v722, %v721
        %739 = vmatpush.bf16.msra.mxu0 %v730
        %740 = vmatpush.bf16.msra.mxu0 %v729
        %741 = vmatpush.bf16.msra.mxu0 %v728
        %742 = vmatpush.bf16.msra.mxu0 %v727
        %743 = vmatpush.bf16.msra.mxu0 %v726
        %744 = vmatpush.bf16.msra.mxu0 %v725
        %745 = vmatpush.bf16.msra.mxu0 %v724
        %746 = vmatpush.bf16.msra.mxu0 %v723
        %747 = vmatmul.bf16.gmra.mxu0 %v673
        %v748 = vpop.f32.mrf.mxu0
        %v749 = vadd.f32 0.0, %v748
        %v750 = vpop.f32.mrf.mxu0
        %v751 = vadd.f32 0.0, %v750
        %752 = vmatmul.bf16.gmra.mxu0 %v674
        %v753 = vpop.f32.mrf.mxu0
        %v754 = vadd.f32 0.0, %v753
        %v755 = vpop.f32.mrf.mxu0
        %v756 = vadd.f32 0.0, %v755
        %757 = vdwg.mxu0
        %v758 = vmul.f32 %v749, 0.01
        %v759 = vmul.f32 %v751, 0.01
        %v760 = vmul.f32 %v754, 0.01
        %v761 = vmul.f32 %v756, 0.01
        %v762 = vmax.f32 %v749, %v758
        %v763 = vmax.f32 %v751, %v759
        %v764 = vmax.f32 %v754, %v760
        %v765 = vmax.f32 %v756, %v761
        %v766 = vpack.c.bf16 %v763, %v762
        %v767 = vpack.c.bf16 %v765, %v764
        %s768 = scalar_lea.vmem %s9, 64
        %v769 = vld [vmem:[%s768] sm:$0xf]
        %v770 = vld [vmem:[%s768 + $0x4] sm:$0xf]
        %v771 = vld [vmem:[%s768 + $0x8] sm:$0xf]
        %v772 = vld [vmem:[%s768 + $0xc] sm:$0xf]
        %v773 = vld [vmem:[%s768 + $0x10] sm:$0xf]
        %v774 = vld [vmem:[%s768 + $0x14] sm:$0xf]
        %v775 = vld [vmem:[%s768 + $0x18] sm:$0xf]
        %v776 = vld [vmem:[%s768 + $0x1c] sm:$0xf]
        %v777 = vld [vmem:[%s768 + $0x20] sm:$0xf]
        %v778 = vld [vmem:[%s768 + $0x24] sm:$0xf]
        %v779 = vld [vmem:[%s768 + $0x28] sm:$0xf]
        %v780 = vld [vmem:[%s768 + $0x2c] sm:$0xf]
        %v781 = vld [vmem:[%s768 + $0x30] sm:$0xf]
        %v782 = vld [vmem:[%s768 + $0x34] sm:$0xf]
        %v783 = vld [vmem:[%s768 + $0x38] sm:$0xf]
        %v784 = vld [vmem:[%s768 + $0x3c] sm:$0xf]
        %v801 = vunpack.c.l.b16 %v769
        %v802 = vunpack.c.l.b16 %v770
        %v803 = vunpack.c.l.b16 %v771
        %v804 = vunpack.c.l.b16 %v772
        %v805 = vunpack.c.l.b16 %v773
        %v806 = vunpack.c.l.b16 %v774
        %v807 = vunpack.c.l.b16 %v775
        %v808 = vunpack.c.l.b16 %v776
        %v809 = vunpack.c.l.b16 %v777
        %v810 = vunpack.c.l.b16 %v778
        %v811 = vunpack.c.l.b16 %v779
        %v812 = vunpack.c.l.b16 %v780
        %v813 = vunpack.c.l.b16 %v781
        %v814 = vunpack.c.l.b16 %v782
        %v815 = vunpack.c.l.b16 %v783
        %v816 = vunpack.c.l.b16 %v784
        %v817 = vpack.c.b16 %v802, %v801
        %v818 = vpack.c.b16 %v804, %v803
        %v819 = vpack.c.b16 %v806, %v805
        %v820 = vpack.c.b16 %v808, %v807
        %v821 = vpack.c.b16 %v810, %v809
        %v822 = vpack.c.b16 %v812, %v811
        %v823 = vpack.c.b16 %v814, %v813
        %v824 = vpack.c.b16 %v816, %v815
        %833 = vmatpush.bf16.msra.mxu0 %v824
        %834 = vmatpush.bf16.msra.mxu0 %v823
        %835 = vmatpush.bf16.msra.mxu0 %v822
        %836 = vmatpush.bf16.msra.mxu0 %v821
        %837 = vmatpush.bf16.msra.mxu0 %v820
        %838 = vmatpush.bf16.msra.mxu0 %v819
        %839 = vmatpush.bf16.msra.mxu0 %v818
        %840 = vmatpush.bf16.msra.mxu0 %v817
        %841 = vmatmul.bf16.gmra.mxu0 %v766
        %v842 = vpop.f32.mrf.mxu0
        %v843 = vadd.f32 0.0, %v842
        %v844 = vpop.f32.mrf.mxu0
        %v845 = vadd.f32 0.0, %v844
        %846 = vmatmul.bf16.gmra.mxu0 %v767
        %v847 = vpop.f32.mrf.mxu0
        %v848 = vadd.f32 0.0, %v847
        %v849 = vpop.f32.mrf.mxu0
        %v850 = vadd.f32 0.0, %v849
        %851 = vdwg.mxu0
        %v852 = vmul.f32 %v843, 0.01
        %v853 = vmul.f32 %v845, 0.01
        %v854 = vmul.f32 %v848, 0.01
        %v855 = vmul.f32 %v850, 0.01
        %v856 = vmax.f32 %v843, %v852
        %v857 = vmax.f32 %v845, %v853
        %v858 = vmax.f32 %v848, %v854
        %v859 = vmax.f32 %v850, %v855
        %v860 = vld [vmem:[%s10] sm:$0x7]
        %v861 = vperm.slane %v860, 0
        %v862 = vmul.f32 %v856, %v861
        %v863 = vmul.f32 %v857, %v861
        %v864 = vmul.f32 %v858, %v861
        %v865 = vmul.f32 %v859, %v861
        %866 = vadd.xlane.f32.xlu0 %v862
        %v867 = vpop.xlane.xlu0 %866
        %868 = vadd.xlane.f32.xlu0 %v863
        %v869 = vpop.xlane.xlu0 %868
        %870 = vadd.xlane.f32.xlu0 %v864
        %v871 = vpop.xlane.xlu0 %870
        %872 = vadd.xlane.f32.xlu0 %v865
        %v873 = vpop.xlane.xlu0 %872
        %v874 = vperm.slane %v860, 1
        %v875 = vmul.f32 %v856, %v874
        %v876 = vmul.f32 %v857, %v874
        %v877 = vmul.f32 %v858, %v874
        %v878 = vmul.f32 %v859, %v874
        %879 = vadd.xlane.f32.xlu0 %v875
        %v880 = vpop.xlane.xlu0 %879
        %881 = vadd.xlane.f32.xlu0 %v876
        %v882 = vpop.xlane.xlu0 %881
        %883 = vadd.xlane.f32.xlu0 %v877
        %v884 = vpop.xlane.xlu0 %883
        %885 = vadd.xlane.f32.xlu0 %v878
        %v886 = vpop.xlane.xlu0 %885
        %v887 = vperm.slane %v860, 2
        %v888 = vmul.f32 %v856, %v887
        %v889 = vmul.f32 %v857, %v887
        %v890 = vmul.f32 %v858, %v887
        %v891 = vmul.f32 %v859, %v887
        %892 = vadd.xlane.f32.xlu0 %v888
        %v893 = vpop.xlane.xlu0 %892
        %894 = vadd.xlane.f32.xlu0 %v889
        %v895 = vpop.xlane.xlu0 %894
        %896 = vadd.xlane.f32.xlu0 %v890
        %v897 = vpop.xlane.xlu0 %896
        %898 = vadd.xlane.f32.xlu0 %v891
        %v899 = vpop.xlane.xlu0 %898
        %vm900 = vcmask 7168
        %v901 = vsel %vm900, %v867, %v880
        %v902 = vsel %vm900, %v869, %v882
        %v903 = vsel %vm900, %v871, %v884
        %v904 = vsel %vm900, %v873, %v886
        %vm905 = vcmask 15360
        %v906 = vsel %vm905, %v901, %v893
        %v907 = vsel %vm905, %v902, %v895
        %v908 = vsel %vm905, %v903, %v897
        %v909 = vsel %vm905, %v904, %v899
        %vm910 = vcmask 23552
        %911 = vst.msk [vmem:[%s442] sm:$0xff] %vm910, %v906
        %912 = vst.msk [vmem:[%s442 + $0x8] sm:$0xff] %vm910, %v907
        %913 = vst.msk [vmem:[%s442 + $0x10] sm:$0xff] %vm910, %v908
        %914 = vst.msk [vmem:[%s442 + $0x18] sm:$0xff] %vm910, %v909
        %s915 = smul.u32 4, %s26
        %p916 = scmp.lt.s32.totalorder %s915, 7
        %s917 = scalar_select %p916, %s915, 7
        %s918 = smul.addr %s917, 8
        %s919 = scalar_lea.vmem %s11, %s918
        // Predicated region
        $region73: #{history_mlp_forward.1} parent=63 // pred_check
          %p920 = pneg %p285
        $region74: #{history_mlp_forward.1} parent=63 // pred_check_branch
          %922 = sbr.rel (%p920) target = $region76
        $region75: #{history_mlp_forward.1} parent=63 // pred_region
          %s923 = smul.u32 4, %s26
        $region76: #{history_mlp_forward.1} parent=63 // pred_fallthru
          _
      $region64: #{history_mlp_forward.1} parent=5 // pred_fallthru
        _
      %p924 = scmp.le.s32.totalorder 2, %s21
      // Predicated region
      $region77: #{history_mlp_forward.1} parent=5 // pred_check
        %p925 = pneg %p924
      $region78: #{history_mlp_forward.1} parent=5 // pred_check_branch
        %927 = sbr.rel (%p925) target = $region80
      $region79: #{history_mlp_forward.1} parent=5 // pred_region
        %s928 = ssub.s32 %s21, 2
        // Predicated region
        $region81: #{history_mlp_forward.1} parent=79 // pred_check
          %p929 = pneg %p291
        $region82: #{history_mlp_forward.1} parent=79 // pred_check_branch
          %931 = sbr.rel (%p929) target = $region84
        $region83: #{history_mlp_forward.1} parent=79 // pred_region
          %s932 = smul.u32 4, %s27
          %p933 = scmp.lt.s32.totalorder %s932, 7
          %s934 = scalar_select %p933, %s932, 7
          %s935 = smul.addr %s934, 8
          %s936 = scalar_lea.vmem %s11, %s935
        $region84: #{history_mlp_forward.1} parent=79 // pred_fallthru
          _
      $region80: #{history_mlp_forward.1} parent=5 // pred_fallthru
        _
    $region6: #{history_mlp_forward.1} parent=1 // loop_footer
      %s25 = sadd.s32 1, %s21
    $region7: #{history_mlp_forward.1} parent=1 // loop_footer_branch
      %20 = sbr.rel target = $region3
    $region8: #{history_mlp_forward.1} parent=1 // loop_exit
      _
    %937 = vsyncpa [#allocation4], 1
    %s938 = scalar_lea.sflag [#allocation4], 1
    %939 = vsyncpa %s938, 1
    %940 = vsyncpa [#allocation6], 1

</llo_original>
